<compile_context>
chip_gen: v7x
topology: tpu7x:2x2x1
jax: 0.10.0
libtpu: 0.0.40
codegen_flags: <defaults>
</compile_context>

<pallas_src>
import math

import jax
import jax.numpy as jnp
from jax.experimental import pallas as pl
from jax.experimental.pallas import tpu as pltpu

_LANE = 128


# ----------------------------- kernel --------------------------------------


def _pos_enc_kernel(x_ref, pe_ref, o_ref):
    # x_ref: (B, T) slab of the flattened input; pe_ref: (1, T) shared table
    # slab.  Broadcast add over the leading (batch) dim, dtype-native.
    o_ref[...] = x_ref[...] + pe_ref[...]


# ----------------------------- pe buffer ------------------------------------


def make_positional_encoding_table(d_model, max_len=5000, dtype=jnp.float32):
    """Builds the (1, max_len, d_model) sinusoidal table (the registered buffer)."""
    position = jnp.arange(max_len, dtype=jnp.float32)[:, None]               # (L, 1)
    div_term = jnp.exp(
        jnp.arange(0, d_model, 2, dtype=jnp.float32)
        * (-math.log(10000.0) / d_model))                                    # (ceil(D/2),)
    angles = position * div_term                                             # (L, ceil(D/2))
    pe = jnp.zeros((max_len, d_model), dtype=jnp.float32)
    pe = pe.at[:, 0::2].set(jnp.sin(angles))
    # Truncate the cos half so odd d_model is also well-defined (the PyTorch
    # reference would error there).
    pe = pe.at[:, 1::2].set(jnp.cos(angles)[:, : d_model // 2])
    return pe[None, :, :].astype(dtype)                                      # (1, L, D)


# ----------------------------- tiling ---------------------------------------


def _pick_tile(total_len, batch, itemsize, target_block_bytes=4 << 20):
    """Lane-aligned tile of the flattened S*D axis, sized by a byte budget."""
    lane_padded = pl.cdiv(total_len, _LANE) * _LANE
    # ~4 MiB per x block -> near-roofline DMA efficiency for a mem-bound add.
    t = max(_LANE, (target_block_bytes // (max(batch, 1) * itemsize)) // _LANE * _LANE)
    t = min(t, lane_padded)
    # Keep >= 2 grid steps when the array allows it: v7x has 2 TensorCores per
    # chip and a single-step grid also disables double-buffered pipelining.
    if pl.cdiv(total_len, t) < 2 and lane_padded > _LANE:
        t = pl.cdiv(pl.cdiv(total_len, 2), _LANE) * _LANE
    return t


# ----------------------------- wrapper --------------------------------------


@jax.jit
def positional_encoding_forward(x, pe):
    """x: (B, S, D); pe: (1, max_len, D) with max_len >= S. Returns x + pe[:, :S]."""
    B, S, D = x.shape
    assert pe.shape[0] == 1 and pe.shape[2] == D and pe.shape[1] >= S

    # Cast the table to x.dtype once (no per-element f32 round trip in the
    # kernel; halves the pe DMA bytes for bf16 inputs) and flatten seq*d_model
    # into one lane axis so stores are lane-dense even when D < 128.
    pe_flat = pe[0, :S, :].astype(x.dtype).reshape(1, S * D)
    x_flat = x.reshape(B, S * D)

    L = S * D
    itemsize = jnp.dtype(x.dtype).itemsize
    t = _pick_tile(L, B, itemsize)
    num_tiles = pl.cdiv(L, t)  # ragged last tile handled by Pallas boundary masking

    # Double-buffered footprint: x + out blocks (B, t) and the pe block (1, t).
    footprint = 2 * t * (2 * B + 1) * itemsize
    vmem_limit = int(min(max(2 * footprint, 16 << 20), 48 << 20))  # headroom on v7x

    y_flat = pl.pallas_call(
        _pos_enc_kernel,
        out_shape=jax.ShapeDtypeStruct((B, L), x.dtype),
        grid_spec=pltpu.PrefetchScalarGridSpec(
            num_scalar_prefetch=0,
            grid=(num_tiles,),
            in_specs=[
                pl.BlockSpec((B, t), lambda j: (0, j)),   # x slab
                pl.BlockSpec((1, t), lambda j: (0, j)),   # shared pe slab
            ],
            out_specs=pl.BlockSpec((B, t), lambda j: (0, j)),
        ),
        compiler_params=pltpu.CompilerParams(
            dimension_semantics=("parallel",),
            vmem_limit_bytes=vmem_limit,
        ),
    )(x_flat, pe_flat)

    return y_flat.reshape(B, S, D)


# ----------------------------- reference ------------------------------------


def positional_encoding_ref(x, pe):
    return x + pe[:, : x.shape[1], :].astype(x.dtype)


# ----------------------------- main -----------------------------------------

if __name__ == "__main__":
    key = jax.random.PRNGKey(0)

    # Small shapes consistent with the module: batch=2, seq=8, d_model=32.
    B, S, D = 2, 8, 32
    x = jax.random.normal(key, (B, S, D), dtype=jnp.float32)
    pe = make_positional_encoding_table(D, max_len=16)

    y = positional_encoding_forward(x, pe)
    jax.block_until_ready(y)

    y_ref = positional_encoding_ref(x, pe)
    assert y.shape == x.shape and y.dtype == x.dtype
    assert jnp.allclose(y, y_ref, atol=1e-6), "positional encoding mismatch"

    # Second check: multi-step grid with a ragged last tile (S*D = 4800, not a
    # multiple of 128) to exercise the cdiv / boundary-masking path.
    B2, S2, D2 = 2, 100, 48
    x2 = jax.random.normal(jax.random.PRNGKey(1), (B2, S2, D2), dtype=jnp.float32)
    pe2 = make_positional_encoding_table(D2, max_len=128)
    y2 = positional_encoding_forward(x2, pe2)
    jax.block_until_ready(y2)
    assert jnp.allclose(y2, positional_encoding_ref(x2, pe2), atol=1e-6), \
        "tiled positional encoding mismatch"

    print("KERNEL_OK")
</pallas_src>

<mosaic_0001>
module attributes {stable_mosaic.version = 11 : i64} {
  func.func @_pos_enc_kernel(%arg0: i32, %arg1: memref<2x128xf32, #tpu.memory_space<vmem>>, %arg2: memref<1x128xf32, #tpu.memory_space<vmem>>, %arg3: memref<2x128xf32, #tpu.memory_space<vmem>>) attributes {dimension_semantics = [#tpu.dimension_semantics<parallel>], iteration_bounds = array<i64: 2>, scalar_prefetch = 0 : i64, scratch_operands = 0 : i64, tpu.core_type = #tpu.core_type<tc>, window_params = [{transform_indices = @transform_0, window_bounds = array<i64: 2, 128>}, {transform_indices = @transform_1, window_bounds = array<i64: 1, 128>}, {transform_indices = @transform_2, window_bounds = array<i64: 2, 128>}]} {
    %c0 = arith.constant 0 : index
    %c0_0 = arith.constant 0 : index
    %0 = vector.load %arg1[%c0, %c0_0] : memref<2x128xf32, #tpu.memory_space<vmem>>, vector<2x128xf32>
    %c0_1 = arith.constant 0 : index
    %c0_2 = arith.constant 0 : index
    %1 = vector.load %arg2[%c0_1, %c0_2] : memref<1x128xf32, #tpu.memory_space<vmem>>, vector<1x128xf32>
    %2 = vector.broadcast %1 : vector<1x128xf32> to vector<2x128xf32>
    %3 = arith.addf %0, %2 : vector<2x128xf32>
    %c0_3 = arith.constant 0 : index
    %c0_4 = arith.constant 0 : index
    %4 = vector.load %arg3[%c0_3, %c0_4] : memref<2x128xf32, #tpu.memory_space<vmem>>, vector<2x128xf32>
    tpu.vector_store %arg3[%c0_3, %c0_4], %3 {strides = array<i32>} : memref<2x128xf32, #tpu.memory_space<vmem>>, vector<2x128xf32>,
    return
  }
  func.func @transform_0(%arg0: i32) -> (i32, i32) {
    %c0_i32 = arith.constant 0 : i32
    %c0_i32_0 = arith.constant 0 : i32
    return %c0_i32, %arg0 : i32, i32
  }
  func.func @transform_1(%arg0: i32) -> (i32, i32) {
    %c0_i32 = arith.constant 0 : i32
    %c0_i32_0 = arith.constant 0 : i32
    return %c0_i32, %arg0 : i32, i32
  }
  func.func @transform_2(%arg0: i32) -> (i32, i32) {
    %c0_i32 = arith.constant 0 : i32
    %c0_i32_0 = arith.constant 0 : i32
    return %c0_i32, %arg0 : i32, i32
  }
}

</mosaic_0001>

<llo_original>
// kernel: squeeze.1
$region0: #{squeeze.1}
  %s0 = inlined_call_operand.vmem [shape: f32[1,8,32], index: 0, kind: input, shape index: {}]
  %s1 = inlined_call_operand.vmem [shape: f32[1,256], index: 1, kind: output, shape index: {}]
  $region1: #{squeeze.1} parent=0
    #allocation0 [shape = 'u8[8192]{0}', space=vmem, size = 0x2000, scoped, tag = 'scoped mem for output reshape']
    %s2 = smov 3
    %v3 = vld [vmem:[%s0] ss:$4 sm:%s2]
    %vm4 = vcmask 261120
    %5 = vst.msk [vmem:[#allocation0] ss:$8 sm:$0x3] %vm4, %v3
    %s6 = scalar_lea.vmem %s0, 3
    %s7 = smov 3
    %v8 = vld [vmem:[%s6] ss:$4 sm:%s7]
    %9 = vrot.lane.b32.xlu0 %v8, 96
    %v10 = vpop.permute.xlu0 %9
    %vm11 = vcmask 1048320
    %12 = vst.msk [vmem:[#allocation0] ss:$8 sm:$0x3] %vm11, %v10
    %s13 = scalar_lea.vmem %s0, 2
    %s14 = smov 3
    %v15 = vld [vmem:[%s13] ss:$4 sm:%s14]
    %16 = vrot.lane.b32.xlu0 %v15, 64
    %v17 = vpop.permute.xlu0 %16
    %vm18 = vcmask 785920
    %19 = vst.msk [vmem:[#allocation0] ss:$8 sm:$0x3] %vm18, %v17
    %s20 = scalar_lea.vmem %s0, 1
    %s21 = smov 3
    %v22 = vld [vmem:[%s20] ss:$4 sm:%s21]
    %23 = vrot.lane.b32.xlu0 %v22, 32
    %v24 = vpop.permute.xlu0 %23
    %vm25 = vcmask 523520
    %26 = vst.msk [vmem:[#allocation0] ss:$8 sm:$0x3] %vm25, %v24
    %s28 = sshllo.u32 0, 1
    %v30 = vld [vmem:[#allocation0] sm:%s28]
    %s31 = sshllo.u32 0, 1
    %32 = vst [vmem:[%s1] sm:%s31] %v30
    %s33 = scalar_lea.vmem [#allocation0], 8
    %v34 = vld [vmem:[%s33] sm:%s28]
    %s35 = sshllo.u32 0, 1
    %s36 = scalar_lea.vmem %s1, 1
    %37 = vst [vmem:[%s36] sm:%s35] %v34

// kernel: positional_encoding_forward.1
$region0: #{positional_encoding_forward.1}
  #allocation0 [shape = 'u32[]', space=smem, size = 0x4, offset = 0x4, fixed_abs, tag = 'smem constant byte address 0x4 - core index']
  #allocation1 [shape = 'u32[144,128]{1,0:T(1,128)}', space=vmem, size = 0x12000, scoped, tag = 'internal scratch']
  %s0 = inlined_call_operand.vmem [shape: f32[2,256], index: 0, kind: input, shape index: {}]
  %s1 = inlined_call_operand.vmem [shape: f32[1,256], index: 1, kind: input, shape index: {}]
  %s2 = inlined_call_operand.vmem [shape: f32[2,256], index: 2, kind: output, shape index: {}]
  %s3 = sld [smem:[#allocation0]]
  $region41: #{positional_encoding_forward.1} parent=0
    _
  %s5 = ssub.s32 1, %s3
  %s6 = scalar_select 0, %s5, %s3
  loop: start=0, step=1, limit=4
  $region2: #{positional_encoding_forward.1} parent=0 // loop_pre_header
    _
  $region3: #{positional_encoding_forward.1} parent=0 // loop_header
    %s8 = sphi 0, %s12
    %p9 = scmp.ge.s32.totalorder %s8, 4
    %s18 = sphi 0, %s20
    %s21 = sphi 0, %s18
    %s22 = sphi 0, %s21
    %s38 = sphi 0, %s22
    %s44 = sphi 0, %s46
    %s47 = sphi 0, %s44
    %s48 = sphi 0, %s47
    %s64 = sphi 0, %s48
    %s70 = sphi 0, %s72
    %s73 = sphi 0, %s70
    %s74 = sphi 0, %s73
    %s90 = sphi 0, %s74
  $region4: #{positional_encoding_forward.1} parent=0 // loop_header_branch
    %11 = sbr.rel (%p9) target = $region8
  $region5: #{positional_encoding_forward.1} parent=0 // loop_body
    %s13 = ssub.s32 %s8, 1
    %s14 = ssub.s32 %s8, 2
    %s15 = sadd.s32 %s8, 1
    %s16 = ssub.s32 %s8, %s15
    %p17 = scmp.eq.s32.totalorder %s16, 0
    %s19 = sadd.s32 %s18, 1
    %s20 = scalar_select %p17, %s18, %s19
    %p23 = pneg %p17
    %p24 = scmp.eq.s32.totalorder %s8, 1
    %p25 = por %p23, %p24
    %p26 = scmp.ne.s32.totalorder %s18, %s21
    %p27 = scmp.eq.s32.totalorder %s8, 0
    %p28 = por %p26, %p27
    %p29 = scmp.ne.s32.totalorder %s18, %s21
    %p30 = scmp.eq.s32.totalorder %s13, 1
    %p31 = por %p29, %p30
    %p32 = scmp.ne.s32.totalorder %s21, %s22
    %p33 = scmp.eq.s32.totalorder %s13, 0
    %p34 = por %p32, %p33
    %p35 = scmp.ne.s32.totalorder %s21, %s22
    %p36 = scmp.eq.s32.totalorder %s14, 1
    %p37 = por %p35, %p36
    %p39 = scmp.ne.s32.totalorder %s22, %s38
    %p40 = scmp.eq.s32.totalorder %s14, 0
    %p41 = por %p39, %p40
    %s42 = ssub.s32 %s8, %s15
    %p43 = scmp.eq.s32.totalorder %s42, 0
    %s45 = sadd.s32 %s44, 1
    %s46 = scalar_select %p43, %s44, %s45
    %p49 = pneg %p43
    %p50 = scmp.eq.s32.totalorder %s8, 1
    %p51 = por %p49, %p50
    %p52 = scmp.ne.s32.totalorder %s44, %s47
    %p53 = scmp.eq.s32.totalorder %s8, 0
    %p54 = por %p52, %p53
    %p55 = scmp.ne.s32.totalorder %s44, %s47
    %p56 = scmp.eq.s32.totalorder %s13, 1
    %p57 = por %p55, %p56
    %p58 = scmp.ne.s32.totalorder %s47, %s48
    %p59 = scmp.eq.s32.totalorder %s13, 0
    %p60 = por %p58, %p59
    %p61 = scmp.ne.s32.totalorder %s47, %s48
    %p62 = scmp.eq.s32.totalorder %s14, 1
    %p63 = por %p61, %p62
    %p65 = scmp.ne.s32.totalorder %s48, %s64
    %p66 = scmp.eq.s32.totalorder %s14, 0
    %p67 = por %p65, %p66
    %s68 = ssub.s32 %s8, %s15
    %p69 = scmp.eq.s32.totalorder %s68, 0
    %s71 = sadd.s32 %s70, 1
    %s72 = scalar_select %p69, %s70, %s71
    %p75 = pneg %p69
    %p76 = scmp.eq.s32.totalorder %s8, 1
    %p77 = por %p75, %p76
    %p78 = scmp.ne.s32.totalorder %s70, %s73
    %p79 = scmp.eq.s32.totalorder %s8, 0
    %p80 = por %p78, %p79
    %p81 = scmp.ne.s32.totalorder %s70, %s73
    %p82 = scmp.eq.s32.totalorder %s13, 1
    %p83 = por %p81, %p82
    %p84 = scmp.ne.s32.totalorder %s73, %s74
    %p85 = scmp.eq.s32.totalorder %s13, 0
    %p86 = por %p84, %p85
    %p87 = scmp.ne.s32.totalorder %s73, %s74
    %p88 = scmp.eq.s32.totalorder %s14, 1
    %p89 = por %p87, %p88
    %p91 = scmp.ne.s32.totalorder %s74, %s90
    %p92 = scmp.eq.s32.totalorder %s14, 0
    %p93 = por %p91, %p92
    %p94 = scmp.le.s32.totalorder 1, %s8
    %p95 = scmp.lt.s32.totalorder %s8, 3
    %p96 = pnand %p94, %p95
    %p97 = pneg %p96
    // Predicated region
    $region9: #{positional_encoding_forward.1} parent=5 // pred_check
      _
    $region10: #{positional_encoding_forward.1} parent=5 // pred_check_branch
      %99 = sbr.rel (%p96) target = $region12
    $region11: #{positional_encoding_forward.1} parent=5 // pred_region
      %s100 = ssub.s32 %s8, 1
    $region12: #{positional_encoding_forward.1} parent=5 // pred_fallthru
      _
    %p101 = scmp.lt.s32.totalorder %s8, 2
    // Predicated region
    $region13: #{positional_encoding_forward.1} parent=5 // pred_check
      %p102 = pneg %p101
    $region14: #{positional_encoding_forward.1} parent=5 // pred_check_branch
      %104 = sbr.rel (%p102) target = $region16
    $region15: #{positional_encoding_forward.1} parent=5 // pred_region
      // Predicated region
      $region17: #{positional_encoding_forward.1} parent=15 // pred_check
        %p105 = pneg %p28
      $region18: #{positional_encoding_forward.1} parent=15 // pred_check_branch
        %107 = sbr.rel (%p105) target = $region20
      $region19: #{positional_encoding_forward.1} parent=15 // pred_region
        %p108 = scmp.lt.s32.totalorder %s8, 1
        %s109 = scalar_select %p108, %s8, 1
        %s110 = smul.addr %s109, 2
        %s111 = scalar_lea.vmem %s0, %s110
      $region20: #{positional_encoding_forward.1} parent=15 // pred_fallthru
        _
      // Predicated region
      $region21: #{positional_encoding_forward.1} parent=15 // pred_check
        %p112 = pneg %p54
      $region22: #{positional_encoding_forward.1} parent=15 // pred_check_branch
        %114 = sbr.rel (%p112) target = $region24
      $region23: #{positional_encoding_forward.1} parent=15 // pred_region
        %p115 = scmp.lt.s32.totalorder %s8, 1
        %s116 = scalar_select %p115, %s8, 1
        %s117 = scalar_lea.vmem %s1, %s116
      $region24: #{positional_encoding_forward.1} parent=15 // pred_fallthru
        _
    $region16: #{positional_encoding_forward.1} parent=5 // pred_fallthru
      _
    %p118 = scmp.le.s32.totalorder 1, %s8
    %p119 = scmp.lt.s32.totalorder %s8, 3
    %p120 = pnand %p118, %p119
    %p121 = pneg %p120
    // Predicated region
    $region25: #{positional_encoding_forward.1} parent=5 // pred_check
      _
    $region26: #{positional_encoding_forward.1} parent=5 // pred_check_branch
      %123 = sbr.rel (%p120) target = $region28
    $region27: #{positional_encoding_forward.1} parent=5 // pred_region
      %s124 = ssub.s32 %s8, 1
      %p125 = scmp.lt.s32.totalorder %s13, 1
      %s126 = scalar_select %p125, %s13, 1
      %s127 = smul.addr %s126, 2
      %s128 = scalar_lea.vmem %s0, %s127
      %p129 = pneg %p34
      %p130 = pneg %p31
      %p131 = scmp.lt.s32.totalorder %s13, 1
      %s132 = scalar_select %p131, %s13, 1
      %s133 = scalar_lea.vmem %s1, %s132
      %p134 = pneg %p60
      %p135 = pneg %p57
      %p136 = pneg %p86
      %p137 = pneg %p83
      %p138 = scmp.lt.s32.totalorder %s13, 1
      %s139 = scalar_select %p138, %s13, 1
      %s140 = smul.addr %s139, 2
      %s141 = scalar_lea.vmem %s2, %s140
      %p142 = scmp.lt.s32.totalorder %s13, 1
      %s143 = scalar_select %p142, %s13, 1
      %s144 = smul.addr %s143, 2
      %s145 = scalar_lea.vmem %s0, %s144
      %p146 = scmp.lt.s32.totalorder %s13, 1
      %s147 = scalar_select %p146, %s13, 1
      %s148 = scalar_lea.vmem %s1, %s147
      %p149 = scmp.lt.s32.totalorder %s13, 1
      %s150 = scalar_select %p149, %s13, 1
      %s151 = smul.addr %s150, 2
      %s152 = scalar_lea.vmem %s2, %s151
      %v153 = vld [vmem:[%s145] sm:$0x3]
      %v154 = vld [vmem:[%s148] sm:$0x1]
      %v156 = vlaneseq
      %v157 = vshrl.u32 %v156, 7
      %v158 = vsub.s32 0, %v157
      %v159 = vrot.slane %v154, %v158
      %v161 = vadd.f32 %v153, %v159
      %162 = vst [vmem:[%s152] sm:$0x3] %v161
      %p163 = scmp.lt.s32.totalorder %s13, 1
      %s164 = scalar_select %p163, %s13, 1
      %s165 = smul.addr %s164, 2
      %s166 = scalar_lea.vmem %s2, %s165
      // Predicated region
      $region29: #{positional_encoding_forward.1} parent=27 // pred_check
        %p167 = pneg %p83
      $region30: #{positional_encoding_forward.1} parent=27 // pred_check_branch
        %169 = sbr.rel (%p167) target = $region32
      $region31: #{positional_encoding_forward.1} parent=27 // pred_region
        _
      $region32: #{positional_encoding_forward.1} parent=27 // pred_fallthru
        _
    $region28: #{positional_encoding_forward.1} parent=5 // pred_fallthru
      _
    %p170 = scmp.le.s32.totalorder 2, %s8
    // Predicated region
    $region33: #{positional_encoding_forward.1} parent=5 // pred_check
      %p171 = pneg %p170
    $region34: #{positional_encoding_forward.1} parent=5 // pred_check_branch
      %173 = sbr.rel (%p171) target = $region36
    $region35: #{positional_encoding_forward.1} parent=5 // pred_region
      %s174 = ssub.s32 %s8, 2
      // Predicated region
      $region37: #{positional_encoding_forward.1} parent=35 // pred_check
        %p175 = pneg %p89
      $region38: #{positional_encoding_forward.1} parent=35 // pred_check_branch
        %177 = sbr.rel (%p175) target = $region40
      $region39: #{positional_encoding_forward.1} parent=35 // pred_region
        %p178 = scmp.lt.s32.totalorder %s14, 1
        %s179 = scalar_select %p178, %s14, 1
        %s180 = smul.addr %s179, 2
        %s181 = scalar_lea.vmem %s2, %s180
      $region40: #{positional_encoding_forward.1} parent=35 // pred_fallthru
        _
    $region36: #{positional_encoding_forward.1} parent=5 // pred_fallthru
      _
  $region6: #{positional_encoding_forward.1} parent=0 // loop_footer
    %s12 = sadd.s32 1, %s8
  $region7: #{positional_encoding_forward.1} parent=0 // loop_footer_branch
    %7 = sbr.rel target = $region3
  $region8: #{positional_encoding_forward.1} parent=0 // loop_exit
    _

</llo_original>
